<compile_context>
chip_gen: v6e
topology: v6e:2x2x1
jax: 0.10.0
libtpu: 0.0.40
codegen_flags: <defaults>
</compile_context>

<pallas_src>
import jax
import jax.numpy as jnp
from jax import lax
from jax.experimental import pallas as pl
from jax.experimental.pallas import tpu as pltpu

_LANE = 128
_SUB = 8


def _round_up(n, m):
    return ((n + m - 1) // m) * m


def _cdiv(a, b):
    return -(-a // b)


def _leaky_relu(x, slope=0.01):
    return jnp.where(x > 0, x, slope * x)


def _softplus(x):
    # matches torch.nn.functional.softplus(beta=1, threshold=20); keep the
    # guarded-branch structure (exp on the x>20 branch is masked by the where).
    return jnp.where(x > 20.0, x, jnp.log1p(jnp.exp(x)))


def _num_tensorcores():
    # Only v7x has 2 TensorCores per chip; default to 1 (v5e/v6e/unknown).
    try:
        kind = jax.devices()[0].device_kind.lower()
        if "v7" in kind:
            return 2
    except Exception:
        pass
    return 1


def mlp_kernel(z_ref, w1_ref, b1_ref, w2_ref, b2_ref, w3t_ref, b3t_ref, o_ref):
    # Cast z to the compute dtype *inside* the kernel (post-DMA) -- no extra
    # wrapper-side HBM pass over z.
    z = z_ref[...].astype(w1_ref.dtype)
    h1 = jnp.dot(z, w1_ref[...], preferred_element_type=jnp.float32) + b1_ref[...]
    h1 = _leaky_relu(h1)
    h2 = jnp.dot(h1.astype(w2_ref.dtype), w2_ref[...],
                 preferred_element_type=jnp.float32) + b2_ref[...]
    h2 = _leaky_relu(h2)
    # Layer 3 emitted transposed: (O_pad, H2) x (bm, H2)^T -> (O_pad, bm),
    # giving a lane-dense output block (last dim = bm, multiple of 128).
    h3t = lax.dot_general(w3t_ref[...], h2.astype(w3t_ref.dtype),
                          (((1,), (1,)), ((), ())),
                          preferred_element_type=jnp.float32) + b3t_ref[...]
    o_ref[...] = (_softplus(h3t) + 0.001).astype(o_ref.dtype)


def flexible_var_network(z, params, *, bm=4096, compute_dtype=jnp.bfloat16):
    """z: [N, input_dim]. params: dict with w{1,2,3} ([in,out]) and b{1,2,3} ([1,out])."""
    N, D = z.shape
    w1, b1 = params["w1"], params["b1"]
    w2, b2 = params["w2"], params["b2"]
    w3, b3 = params["w3"], params["b3"]
    H1, H2, O = w1.shape[1], w2.shape[1], w3.shape[1]
    O_pad = _round_up(O, _SUB)

    # Weights in the compute dtype (tiny arrays, one-time cast); biases stay f32
    # since they are added to the f32 accumulator.
    w1c = w1.astype(compute_dtype)
    w2c = w2.astype(compute_dtype)
    b1f = b1.astype(jnp.float32)
    b2f = b2.astype(jnp.float32)
    # Layer-3 weight/bias transposed and sublane-padded for the lane-dense output.
    w3t = jnp.zeros((O_pad, H2), compute_dtype).at[:O].set(w3.T.astype(compute_dtype))
    b3t = jnp.zeros((O_pad, 1), jnp.float32).at[:O].set(
        b3.reshape(O, 1).astype(jnp.float32))

    # --- batch tile & VMEM budget (lane-padded accounting) --------------------
    z_it = jnp.dtype(z.dtype).itemsize
    c_it = jnp.dtype(compute_dtype).itemsize
    lp = lambda n: _round_up(n, _LANE)
    row_bytes = (
        2 * lp(D) * z_it                       # double-buffered z tile (D pads to 128 lanes)
        + 2 * O_pad * 4                        # double-buffered lane-dense out tile
        + (lp(H1) + lp(H2) + lp(O_pad)) * 4    # f32 intermediates h1/h2/h3
        + (lp(D) + lp(H1) + lp(H2)) * c_it     # compute-dtype casts of z/h1/h2
    )
    vmem_budget = 24 * (1 << 20)               # working-set budget, safe on all gens

    n_cores = _num_tensorcores()
    n_al = _round_up(max(N, 1), _LANE)
    bm_eff = min(_round_up(bm, _LANE), n_al)
    bm_cap = max(_LANE, (vmem_budget // row_bytes) // _LANE * _LANE)
    bm_eff = min(bm_eff, bm_cap)
    if n_cores > 1 and n_al >= n_cores * _LANE:
        # v7x only: make sure both TensorCores get work.
        bm_eff = min(bm_eff, _round_up(_cdiv(n_al, n_cores), _LANE))
    steps = _cdiv(n_al, bm_eff)
    if n_cores > 1 and steps > 1:
        steps = _round_up(steps, n_cores)      # balanced grid across TCs
    n_pad = steps * bm_eff

    if n_pad != N:
        z = jnp.pad(z, ((0, n_pad - N), (0, 0)))

    # Only raise the scoped-VMEM limit when we actually need more than v5e's
    # 16 MiB default; cap well below v7x's 64 MiB physical.
    footprint = row_bytes * bm_eff + (1 << 20)
    ck = {"dimension_semantics": ("parallel",)}
    if footprint > 12 * (1 << 20):
        ck["vmem_limit_bytes"] = int(min(48 * (1 << 20),
                                         max(32 * (1 << 20), footprint * 3 // 2)))
    compiler_params = pltpu.CompilerParams(**ck)

    cost = pl.CostEstimate(
        flops=2 * n_pad * (D * H1 + H1 * H2 + H2 * O_pad),
        transcendentals=2 * n_pad * O_pad,     # exp + log1p per output element
        bytes_accessed=(n_pad * D * z_it + n_pad * O_pad * 4
                        + (D * H1 + H1 * H2 + O_pad * H2) * c_it
                        + (H1 + H2 + O_pad) * 4),
    )

    full = lambda shape: pl.BlockSpec(shape, lambda i: (0, 0))  # VMEM-resident consts

    out = pl.pallas_call(
        mlp_kernel,
        out_shape=jax.ShapeDtypeStruct((O_pad, n_pad), jnp.float32),
        grid_spec=pltpu.PrefetchScalarGridSpec(
            num_scalar_prefetch=0,
            grid=(steps,),
            in_specs=[
                pl.BlockSpec((bm_eff, D), lambda i: (i, 0)),    # z tile over batch
                full((D, H1)), full((1, H1)),                   # layer 1
                full((H1, H2)), full((1, H2)),                  # layer 2
                full((O_pad, H2)), full((O_pad, 1)),            # layer 3 (transposed)
            ],
            out_specs=pl.BlockSpec((O_pad, bm_eff), lambda i: (0, i)),
        ),
        compiler_params=compiler_params,
        cost_estimate=cost,
    )(z, w1c, b1f, w2c, b2f, w3t, b3t)

    # (O_pad, n_pad) -> (N, O); the transpose is on the tiny output only.
    return out[:O, :N].T


def init_params(key, input_dim, output_dim):
    """Deterministic synthetic init mimicking nn.Linear default (uniform +/- 1/sqrt(fan_in))."""
    dims = [(input_dim, 50), (50, 20), (20, output_dim)]
    params = {}
    for idx, (fin, fout) in enumerate(dims, start=1):
        key, kw, kb = jax.random.split(key, 3)
        bound = 1.0 / jnp.sqrt(fin)
        params[f"w{idx}"] = jax.random.uniform(
            kw, (fin, fout), jnp.float32, minval=-bound, maxval=bound)
        params[f"b{idx}"] = jax.random.uniform(
            kb, (1, fout), jnp.float32, minval=-bound, maxval=bound)
    return params


def reference(z, params):
    h = z @ params["w1"] + params["b1"]
    h = jnp.where(h > 0, h, 0.01 * h)
    h = h @ params["w2"] + params["b2"]
    h = jnp.where(h > 0, h, 0.01 * h)
    h = h @ params["w3"] + params["b3"]
    return jax.nn.softplus(h) + 0.001


if __name__ == "__main__":
    key = jax.random.PRNGKey(0)
    input_dim, output_dim = 32, 4
    N = 19  # deliberately not a multiple of 8/128 to exercise padding/slicing

    k_param, k_z = jax.random.split(key)
    params = init_params(k_param, input_dim, output_dim)
    z = jax.random.normal(k_z, (N, input_dim), jnp.float32)

    ref = reference(z, params)

    # Production default: bf16 compute, f32 accumulation (dtype-appropriate tol).
    out_bf16 = jax.block_until_ready(flexible_var_network(z, params))
    assert out_bf16.shape == (N, output_dim)
    err_bf16 = jnp.max(jnp.abs(out_bf16 - ref))
    assert jnp.allclose(out_bf16, ref, atol=5e-2, rtol=5e-2), f"bf16 max abs err {err_bf16}"

    # Exact f32 path.
    out_f32 = jax.block_until_ready(
        flexible_var_network(z, params, compute_dtype=jnp.float32))
    err_f32 = jnp.max(jnp.abs(out_f32 - ref))
    assert jnp.allclose(out_f32, ref, atol=1e-5, rtol=1e-5), f"f32 max abs err {err_f32}"

    print("KERNEL_OK")
</pallas_src>

<mosaic_0001>
module attributes {stable_mosaic.version = 11 : i64} {
  func.func @mlp_kernel(%arg0: i32, %arg1: memref<128x32xf32, #tpu.memory_space<vmem>>, %arg2: memref<32x50xbf16, #tpu.memory_space<vmem>>, %arg3: memref<1x50xf32, #tpu.memory_space<vmem>>, %arg4: memref<50x20xbf16, #tpu.memory_space<vmem>>, %arg5: memref<1x20xf32, #tpu.memory_space<vmem>>, %arg6: memref<8x20xbf16, #tpu.memory_space<vmem>>, %arg7: memref<8x1xf32, #tpu.memory_space<vmem>>, %arg8: memref<8x128xf32, #tpu.memory_space<vmem>>) attributes {dimension_semantics = [#tpu.dimension_semantics<parallel>], iteration_bounds = array<i64: 1>, scalar_prefetch = 0 : i64, scratch_operands = 0 : i64, tpu.core_type = #tpu.core_type<tc>, window_params = [{transform_indices = @transform_0, window_bounds = array<i64: 128, 32>}, {pipeline_mode = #tpu.pipeline_mode<synchronous>, transform_indices = @transform_1, window_bounds = array<i64: 32, 50>}, {pipeline_mode = #tpu.pipeline_mode<synchronous>, transform_indices = @transform_2, window_bounds = array<i64: 1, 50>}, {pipeline_mode = #tpu.pipeline_mode<synchronous>, transform_indices = @transform_3, window_bounds = array<i64: 50, 20>}, {pipeline_mode = #tpu.pipeline_mode<synchronous>, transform_indices = @transform_4, window_bounds = array<i64: 1, 20>}, {pipeline_mode = #tpu.pipeline_mode<synchronous>, transform_indices = @transform_5, window_bounds = array<i64: 8, 20>}, {pipeline_mode = #tpu.pipeline_mode<synchronous>, transform_indices = @transform_6, window_bounds = array<i64: 8, 1>}, {transform_indices = @transform_7, window_bounds = array<i64: 8, 128>}]} {
    %c0 = arith.constant 0 : index
    %c0_0 = arith.constant 0 : index
    %0 = vector.load %arg1[%c0, %c0_0] : memref<128x32xf32, #tpu.memory_space<vmem>>, vector<128x32xf32>
    %1 = arith.truncf %0 : vector<128x32xf32> to vector<128x32xbf16>
    %c0_1 = arith.constant 0 : index
    %c0_2 = arith.constant 0 : index
    %2 = vector.load %arg2[%c0_1, %c0_2] : memref<32x50xbf16, #tpu.memory_space<vmem>>, vector<32x50xbf16>
    %cst = arith.constant dense<0.000000e+00> : vector<128x50xf32>
    %3 = tpu.matmul %1, %2, %cst {dimension_numbers = #tpu.dot_dimension_numbers<[1], [0], [0], [1], [0, 0, 1, 1], [], []>} : vector<128x32xbf16>, vector<32x50xbf16>, vector<128x50xf32> -> vector<128x50xf32>
    %c0_3 = arith.constant 0 : index
    %c0_4 = arith.constant 0 : index
    %4 = vector.load %arg3[%c0_3, %c0_4] : memref<1x50xf32, #tpu.memory_space<vmem>>, vector<1x50xf32>
    %5 = vector.broadcast %4 : vector<1x50xf32> to vector<128x50xf32>
    %6 = arith.addf %3, %5 : vector<128x50xf32>
    %cst_5 = arith.constant 0.000000e+00 : f32
    %7 = vector.broadcast %cst_5 : f32 to vector<128x50xf32>
    %8 = arith.cmpf ogt, %6, %7 : vector<128x50xf32>
    %cst_6 = arith.constant 0.00999999977 : f32
    %9 = vector.broadcast %cst_6 : f32 to vector<128x50xf32>
    %10 = arith.mulf %9, %6 : vector<128x50xf32>
    %11 = arith.select %8, %6, %10 : vector<128x50xi1>, vector<128x50xf32>
    %12 = arith.truncf %11 : vector<128x50xf32> to vector<128x50xbf16>
    %c0_7 = arith.constant 0 : index
    %c0_8 = arith.constant 0 : index
    %13 = vector.load %arg4[%c0_7, %c0_8] : memref<50x20xbf16, #tpu.memory_space<vmem>>, vector<50x20xbf16>
    %cst_9 = arith.constant dense<0.000000e+00> : vector<128x20xf32>
    %14 = tpu.matmul %12, %13, %cst_9 {dimension_numbers = #tpu.dot_dimension_numbers<[1], [0], [0], [1], [0, 0, 1, 1], [], []>} : vector<128x50xbf16>, vector<50x20xbf16>, vector<128x20xf32> -> vector<128x20xf32>
    %c0_10 = arith.constant 0 : index
    %c0_11 = arith.constant 0 : index
    %15 = vector.load %arg5[%c0_10, %c0_11] : memref<1x20xf32, #tpu.memory_space<vmem>>, vector<1x20xf32>
    %16 = vector.broadcast %15 : vector<1x20xf32> to vector<128x20xf32>
    %17 = arith.addf %14, %16 : vector<128x20xf32>
    %cst_12 = arith.constant 0.000000e+00 : f32
    %18 = vector.broadcast %cst_12 : f32 to vector<128x20xf32>
    %19 = arith.cmpf ogt, %17, %18 : vector<128x20xf32>
    %cst_13 = arith.constant 0.00999999977 : f32
    %20 = vector.broadcast %cst_13 : f32 to vector<128x20xf32>
    %21 = arith.mulf %20, %17 : vector<128x20xf32>
    %22 = arith.select %19, %17, %21 : vector<128x20xi1>, vector<128x20xf32>
    %c0_14 = arith.constant 0 : index
    %c0_15 = arith.constant 0 : index
    %23 = vector.load %arg6[%c0_14, %c0_15] : memref<8x20xbf16, #tpu.memory_space<vmem>>, vector<8x20xbf16>
    %24 = arith.truncf %22 : vector<128x20xf32> to vector<128x20xbf16>
    %cst_16 = arith.constant dense<0.000000e+00> : vector<8x128xf32>
    %25 = tpu.matmul %23, %24, %cst_16 {dimension_numbers = #tpu.dot_dimension_numbers<[1], [1], [0], [0], [0, 0, 1, 0], [], []>} : vector<8x20xbf16>, vector<128x20xbf16>, vector<8x128xf32> -> vector<8x128xf32>
    %c0_17 = arith.constant 0 : index
    %c0_18 = arith.constant 0 : index
    %26 = vector.load %arg7[%c0_17, %c0_18] : memref<8x1xf32, #tpu.memory_space<vmem>>, vector<8x1xf32>
    %27 = vector.broadcast %26 : vector<8x1xf32> to vector<8x128xf32>
    %28 = arith.addf %25, %27 : vector<8x128xf32>
    %cst_19 = arith.constant 2.000000e+01 : f32
    %29 = vector.broadcast %cst_19 : f32 to vector<8x128xf32>
    %30 = arith.cmpf ogt, %28, %29 : vector<8x128xf32>
    %31 = math.exp %28 : vector<8x128xf32>
    %32 = math.log1p %31 : vector<8x128xf32>
    %33 = arith.select %30, %28, %32 : vector<8x128xi1>, vector<8x128xf32>
    %cst_20 = arith.constant 1.000000e-03 : f32
    %34 = vector.broadcast %cst_20 : f32 to vector<8x128xf32>
    %35 = arith.addf %33, %34 : vector<8x128xf32>
    %c0_21 = arith.constant 0 : index
    %c0_22 = arith.constant 0 : index
    %36 = vector.load %arg8[%c0_21, %c0_22] : memref<8x128xf32, #tpu.memory_space<vmem>>, vector<8x128xf32>
    tpu.vector_store %arg8[%c0_21, %c0_22], %35 {strides = array<i32>} : memref<8x128xf32, #tpu.memory_space<vmem>>, vector<8x128xf32>,
    return
  }
  func.func @transform_0(%arg0: i32) -> (i32, i32) {
    %c0_i32 = arith.constant 0 : i32
    %c0_i32_0 = arith.constant 0 : i32
    return %arg0, %c0_i32 : i32, i32
  }
  func.func @transform_1(%arg0: i32) -> (i32, i32) {
    %c0_i32 = arith.constant 0 : i32
    %c0_i32_0 = arith.constant 0 : i32
    %c0_i32_1 = arith.constant 0 : i32
    return %c0_i32, %c0_i32_0 : i32, i32
  }
  func.func @transform_2(%arg0: i32) -> (i32, i32) {
    %c0_i32 = arith.constant 0 : i32
    %c0_i32_0 = arith.constant 0 : i32
    %c0_i32_1 = arith.constant 0 : i32
    return %c0_i32, %c0_i32_0 : i32, i32
  }
  func.func @transform_3(%arg0: i32) -> (i32, i32) {
    %c0_i32 = arith.constant 0 : i32
    %c0_i32_0 = arith.constant 0 : i32
    %c0_i32_1 = arith.constant 0 : i32
    return %c0_i32, %c0_i32_0 : i32, i32
  }
  func.func @transform_4(%arg0: i32) -> (i32, i32) {
    %c0_i32 = arith.constant 0 : i32
    %c0_i32_0 = arith.constant 0 : i32
    %c0_i32_1 = arith.constant 0 : i32
    return %c0_i32, %c0_i32_0 : i32, i32
  }
  func.func @transform_5(%arg0: i32) -> (i32, i32) {
    %c0_i32 = arith.constant 0 : i32
    %c0_i32_0 = arith.constant 0 : i32
    %c0_i32_1 = arith.constant 0 : i32
    return %c0_i32, %c0_i32_0 : i32, i32
  }
  func.func @transform_6(%arg0: i32) -> (i32, i32) {
    %c0_i32 = arith.constant 0 : i32
    %c0_i32_0 = arith.constant 0 : i32
    %c0_i32_1 = arith.constant 0 : i32
    return %c0_i32, %c0_i32_0 : i32, i32
  }
  func.func @transform_7(%arg0: i32) -> (i32, i32) {
    %c0_i32 = arith.constant 0 : i32
    %c0_i32_0 = arith.constant 0 : i32
    return %c0_i32, %arg0 : i32, i32
  }
}

</mosaic_0001>

<llo_original>
// kernel: tpu_custom_call.1
$region0: #{tpu_custom_call.1}
  #allocation0 [shape = 'u32[]', space=smem, size = 0x4, offset = 0x4, fixed_abs, tag = 'smem constant byte address 0x4 - core index']
  #allocation1 [shape = 'u32[144,128]{1,0:T(1,128)}', space=vmem, size = 0x12000, scoped, tag = 'internal scratch']
  %s0 = inlined_call_operand.vmem [shape: f32[128,32], index: 0, kind: input, shape index: {}]
  %s1 = inlined_call_operand.vmem [shape: bf16[32,50], index: 1, kind: input, shape index: {}]
  %s2 = inlined_call_operand.vmem [shape: f32[1,50], index: 2, kind: input, shape index: {}]
  %s3 = inlined_call_operand.vmem [shape: bf16[50,20], index: 3, kind: input, shape index: {}]
  %s4 = inlined_call_operand.vmem [shape: f32[1,20], index: 4, kind: input, shape index: {}]
  %s5 = inlined_call_operand.vmem [shape: bf16[8,20], index: 5, kind: input, shape index: {}]
  %s6 = inlined_call_operand.vmem [shape: f32[8,1], index: 6, kind: input, shape index: {}]
  %s7 = inlined_call_operand.hbm [shape: f32[8,128], index: 7, kind: output, shape index: {}]
  %s8 = sld [smem:[#allocation0]]
  $region38: #{tpu_custom_call.1} parent=0
    _
  %s10 = ssub.s32 1, %s8
  %s11 = scalar_select 0, %s10, %s8
  $region1: #{tpu_custom_call.1} parent=0
    #allocation2 [shape = 'u8[4096]{0}', space=vmem, size = 0x1000, scoped, tag = 'output window, operand 0, single buffered']
    #allocation3 [shape = 's32[1]{0}', space=sflag, size = 0x4, scoped, tag = 'scoped memory for tpu_custom_call.1']
    %12 = vsyncpa [#allocation3], 0
    // Predicated region
    $region2: #{tpu_custom_call.1} parent=1 // pred_check
      _
    $region3: #{tpu_custom_call.1} parent=1 // pred_check_branch
      %14 = sbr.rel (0) target = $region5
    $region4: #{tpu_custom_call.1} parent=1 // pred_region
      _
    $region5: #{tpu_custom_call.1} parent=1 // pred_fallthru
      _
    // Predicated region
    $region6: #{tpu_custom_call.1} parent=1 // pred_check
      _
    $region7: #{tpu_custom_call.1} parent=1 // pred_check_branch
      %16 = sbr.rel (0) target = $region9
    $region8: #{tpu_custom_call.1} parent=1 // pred_region
      _
    $region9: #{tpu_custom_call.1} parent=1 // pred_fallthru
      _
    // Predicated region
    $region10: #{tpu_custom_call.1} parent=1 // pred_check
      _
    $region11: #{tpu_custom_call.1} parent=1 // pred_check_branch
      %18 = sbr.rel (0) target = $region13
    $region12: #{tpu_custom_call.1} parent=1 // pred_region
      _
    $region13: #{tpu_custom_call.1} parent=1 // pred_fallthru
      _
    // Predicated region
    $region14: #{tpu_custom_call.1} parent=1 // pred_check
      _
    $region15: #{tpu_custom_call.1} parent=1 // pred_check_branch
      %20 = sbr.rel (0) target = $region17
    $region16: #{tpu_custom_call.1} parent=1 // pred_region
      _
    $region17: #{tpu_custom_call.1} parent=1 // pred_fallthru
      _
    // Predicated region
    $region18: #{tpu_custom_call.1} parent=1 // pred_check
      _
    $region19: #{tpu_custom_call.1} parent=1 // pred_check_branch
      %22 = sbr.rel (0) target = $region21
    $region20: #{tpu_custom_call.1} parent=1 // pred_region
      _
    $region21: #{tpu_custom_call.1} parent=1 // pred_fallthru
      _
    // Predicated region
    $region22: #{tpu_custom_call.1} parent=1 // pred_check
      _
    $region23: #{tpu_custom_call.1} parent=1 // pred_check_branch
      %24 = sbr.rel (0) target = $region25
    $region24: #{tpu_custom_call.1} parent=1 // pred_region
      _
    $region25: #{tpu_custom_call.1} parent=1 // pred_fallthru
      _
    // Predicated region
    $region26: #{tpu_custom_call.1} parent=1 // pred_check
      _
    $region27: #{tpu_custom_call.1} parent=1 // pred_check_branch
      %26 = sbr.rel (0) target = $region29
    $region28: #{tpu_custom_call.1} parent=1 // pred_region
      _
    $region29: #{tpu_custom_call.1} parent=1 // pred_fallthru
      _
    %v28 = vld [vmem:[%s0] sm:$0xff]
    %v29 = vld [vmem:[%s0 + $0x8] sm:$0xff]
    %v30 = vld [vmem:[%s0 + $0x10] sm:$0xff]
    %v31 = vld [vmem:[%s0 + $0x18] sm:$0xff]
    %v32 = vld [vmem:[%s0 + $0x20] sm:$0xff]
    %v33 = vld [vmem:[%s0 + $0x28] sm:$0xff]
    %v34 = vld [vmem:[%s0 + $0x30] sm:$0xff]
    %v35 = vld [vmem:[%s0 + $0x38] sm:$0xff]
    %v36 = vld [vmem:[%s0 + $0x40] sm:$0xff]
    %v37 = vld [vmem:[%s0 + $0x48] sm:$0xff]
    %v38 = vld [vmem:[%s0 + $0x50] sm:$0xff]
    %v39 = vld [vmem:[%s0 + $0x58] sm:$0xff]
    %v40 = vld [vmem:[%s0 + $0x60] sm:$0xff]
    %v41 = vld [vmem:[%s0 + $0x68] sm:$0xff]
    %v42 = vld [vmem:[%s0 + $0x70] sm:$0xff]
    %v43 = vld [vmem:[%s0 + $0x78] sm:$0xff]
    %v44 = vpack.c.bf16 %v29, %v28
    %v45 = vpack.c.bf16 %v31, %v30
    %v46 = vpack.c.bf16 %v33, %v32
    %v47 = vpack.c.bf16 %v35, %v34
    %v48 = vpack.c.bf16 %v37, %v36
    %v49 = vpack.c.bf16 %v39, %v38
    %v50 = vpack.c.bf16 %v41, %v40
    %v51 = vpack.c.bf16 %v43, %v42
    %v52 = vld [vmem:[%s1] sm:$0xf]
    %v53 = vld [vmem:[%s1 + $0x4] sm:$0xf]
    %v54 = vld [vmem:[%s1 + $0x8] sm:$0xf]
    %v55 = vld [vmem:[%s1 + $0xc] sm:$0xf]
    %v56 = vld [vmem:[%s2] sm:$0x1]
    %v58 = vlaneseq
    %v59 = vshrl.u32 %v58, 7
    %v60 = vsub.s32 0, %v59
    %v61 = vrot.slane %v56, %v60
    %v67 = vunpack.c.l.b16 %v52
    %v68 = vunpack.c.l.b16 %v53
    %v69 = vunpack.c.l.b16 %v54
    %v70 = vunpack.c.l.b16 %v55
    %v71 = vpack.c.b16 %v68, %v67
    %v72 = vpack.c.b16 %v70, %v69
    %vm75 = vcmask 261120
    %v77 = vsel %vm75, %v44, 0
    %v80 = vsel %vm75, %v45, 0
    %v83 = vsel %vm75, %v46, 0
    %v86 = vsel %vm75, %v47, 0
    %v89 = vsel %vm75, %v48, 0
    %v92 = vsel %vm75, %v49, 0
    %v95 = vsel %vm75, %v50, 0
    %v98 = vsel %vm75, %v51, 0
    %100 = vmatprep.subr.bf16.mxu0 0
    %101 = vmatpush1.bf16.msra.mxu0 0
    %102 = vmatprep.subr.bf16.mxu0 0
    %103 = vmatpush1.bf16.msra.mxu0 0
    %104 = vmatprep.subr.bf16.mxu0 0
    %105 = vmatpush1.bf16.msra.mxu0 0
    %106 = vmatprep.subr.bf16.mxu0 0
    %107 = vmatpush1.bf16.msra.mxu0 0
    %108 = vmatprep.subr.bf16.mxu0 0
    %109 = vmatpush1.bf16.msra.mxu0 0
    %110 = vmatprep.subr.bf16.mxu0 0
    %111 = vmatpush1.bf16.msra.mxu0 0
    %112 = vmatprep.subr.bf16.mxu0 0
    %113 = vmatpush1.bf16.msra.mxu0 %v72
    %114 = vmatprep.subr.bf16.mxu0 0
    %115 = vmatpush1.bf16.msra.mxu0 %v71
    %116 = vmatprep.subr.bf16.mxu0 0
    %117 = vmatpush2.bf16.msra.mxu0 0
    %118 = vmatprep.subr.bf16.mxu0 0
    %119 = vmatpush2.bf16.msra.mxu0 0
    %120 = vmatprep.subr.bf16.mxu0 0
    %121 = vmatpush2.bf16.msra.mxu0 0
    %122 = vmatprep.subr.bf16.mxu0 0
    %123 = vmatpush2.bf16.msra.mxu0 0
    %124 = vmatprep.subr.bf16.mxu0 0
    %125 = vmatpush2.bf16.msra.mxu0 0
    %126 = vmatprep.subr.bf16.mxu0 0
    %127 = vmatpush2.bf16.msra.mxu0 0
    %128 = vmatprep.subr.bf16.mxu0 0
    %129 = vmatpush2.bf16.msra.mxu0 0
    %130 = vmatprep.subr.bf16.mxu0 0
    %131 = vmatpush2.bf16.msra.mxu0 0
    %132 = vmatprep.mubr.bf16.mxu0 0
    %133 = vmatmul.mubr.bf16.gmra.mxu0 %v77
    %v134 = vpop.f32.mrf.mxu0
    %v135 = vadd.f32 %v61, %v134
    %v136 = vpop.f32.mrf.mxu0
    %v137 = vpop.f32.mrf.mxu0
    %v138 = vadd.f32 %v61, %v137
    %v139 = vpop.f32.mrf.mxu0
    %140 = vmatprep.mubr.bf16.mxu0 0
    %141 = vmatmul.mubr.bf16.gmra.mxu0 %v80
    %v142 = vpop.f32.mrf.mxu0
    %v143 = vadd.f32 %v61, %v142
    %v144 = vpop.f32.mrf.mxu0
    %v145 = vpop.f32.mrf.mxu0
    %v146 = vadd.f32 %v61, %v145
    %v147 = vpop.f32.mrf.mxu0
    %148 = vmatprep.mubr.bf16.mxu0 0
    %149 = vmatmul.mubr.bf16.gmra.mxu0 %v83
    %v150 = vpop.f32.mrf.mxu0
    %v151 = vadd.f32 %v61, %v150
    %v152 = vpop.f32.mrf.mxu0
    %v153 = vpop.f32.mrf.mxu0
    %v154 = vadd.f32 %v61, %v153
    %v155 = vpop.f32.mrf.mxu0
    %156 = vmatprep.mubr.bf16.mxu0 0
    %157 = vmatmul.mubr.bf16.gmra.mxu0 %v86
    %v158 = vpop.f32.mrf.mxu0
    %v159 = vadd.f32 %v61, %v158
    %v160 = vpop.f32.mrf.mxu0
    %v161 = vpop.f32.mrf.mxu0
    %v162 = vadd.f32 %v61, %v161
    %v163 = vpop.f32.mrf.mxu0
    %164 = vmatprep.mubr.bf16.mxu0 0
    %165 = vmatmul.mubr.bf16.gmra.mxu0 %v89
    %v166 = vpop.f32.mrf.mxu0
    %v167 = vadd.f32 %v61, %v166
    %v168 = vpop.f32.mrf.mxu0
    %v169 = vpop.f32.mrf.mxu0
    %v170 = vadd.f32 %v61, %v169
    %v171 = vpop.f32.mrf.mxu0
    %172 = vmatprep.mubr.bf16.mxu0 0
    %173 = vmatmul.mubr.bf16.gmra.mxu0 %v92
    %v174 = vpop.f32.mrf.mxu0
    %v175 = vadd.f32 %v61, %v174
    %v176 = vpop.f32.mrf.mxu0
    %v177 = vpop.f32.mrf.mxu0
    %v178 = vadd.f32 %v61, %v177
    %v179 = vpop.f32.mrf.mxu0
    %180 = vmatprep.mubr.bf16.mxu0 0
    %181 = vmatmul.mubr.bf16.gmra.mxu0 %v95
    %v182 = vpop.f32.mrf.mxu0
    %v183 = vadd.f32 %v61, %v182
    %v184 = vpop.f32.mrf.mxu0
    %v185 = vpop.f32.mrf.mxu0
    %v186 = vadd.f32 %v61, %v185
    %v187 = vpop.f32.mrf.mxu0
    %188 = vmatprep.mubr.bf16.mxu0 0
    %189 = vmatmul.mubr.bf16.gmra.mxu0 %v98
    %v190 = vpop.f32.mrf.mxu0
    %v191 = vadd.f32 %v61, %v190
    %v192 = vpop.f32.mrf.mxu0
    %v193 = vpop.f32.mrf.mxu0
    %v194 = vadd.f32 %v61, %v193
    %v195 = vpop.f32.mrf.mxu0
    %196 = vdwg.mxu0
    %vm197 = vcmp.gt.f32.partialorder %v135, 0.0
    %vm198 = vcmp.gt.f32.partialorder %v138, 0.0
    %vm199 = vcmp.gt.f32.partialorder %v143, 0.0
    %vm200 = vcmp.gt.f32.partialorder %v146, 0.0
    %vm201 = vcmp.gt.f32.partialorder %v151, 0.0
    %vm202 = vcmp.gt.f32.partialorder %v154, 0.0
    %vm203 = vcmp.gt.f32.partialorder %v159, 0.0
    %vm204 = vcmp.gt.f32.partialorder %v162, 0.0
    %vm205 = vcmp.gt.f32.partialorder %v167, 0.0
    %vm206 = vcmp.gt.f32.partialorder %v170, 0.0
    %vm207 = vcmp.gt.f32.partialorder %v175, 0.0
    %vm208 = vcmp.gt.f32.partialorder %v178, 0.0
    %vm209 = vcmp.gt.f32.partialorder %v183, 0.0
    %vm210 = vcmp.gt.f32.partialorder %v186, 0.0
    %vm211 = vcmp.gt.f32.partialorder %v191, 0.0
    %vm212 = vcmp.gt.f32.partialorder %v194, 0.0
    %v213 = vmul.f32 %v135, 0.01
    %v214 = vmul.f32 %v138, 0.01
    %v215 = vmul.f32 %v143, 0.01
    %v216 = vmul.f32 %v146, 0.01
    %v217 = vmul.f32 %v151, 0.01
    %v218 = vmul.f32 %v154, 0.01
    %v219 = vmul.f32 %v159, 0.01
    %v220 = vmul.f32 %v162, 0.01
    %v221 = vmul.f32 %v167, 0.01
    %v222 = vmul.f32 %v170, 0.01
    %v223 = vmul.f32 %v175, 0.01
    %v224 = vmul.f32 %v178, 0.01
    %v225 = vmul.f32 %v183, 0.01
    %v226 = vmul.f32 %v186, 0.01
    %v227 = vmul.f32 %v191, 0.01
    %v228 = vmul.f32 %v194, 0.01
    %v229 = vsel %vm197, %v135, %v213
    %v230 = vsel %vm198, %v138, %v214
    %v231 = vsel %vm199, %v143, %v215
    %v232 = vsel %vm200, %v146, %v216
    %v233 = vsel %vm201, %v151, %v217
    %v234 = vsel %vm202, %v154, %v218
    %v235 = vsel %vm203, %v159, %v219
    %v236 = vsel %vm204, %v162, %v220
    %v237 = vsel %vm205, %v167, %v221
    %v238 = vsel %vm206, %v170, %v222
    %v239 = vsel %vm207, %v175, %v223
    %v240 = vsel %vm208, %v178, %v224
    %v241 = vsel %vm209, %v183, %v225
    %v242 = vsel %vm210, %v186, %v226
    %v243 = vsel %vm211, %v191, %v227
    %v244 = vsel %vm212, %v194, %v228
    %v245 = vpack.c.bf16 %v230, %v229
    %v246 = vpack.c.bf16 %v232, %v231
    %v247 = vpack.c.bf16 %v234, %v233
    %v248 = vpack.c.bf16 %v236, %v235
    %v249 = vpack.c.bf16 %v238, %v237
    %v250 = vpack.c.bf16 %v240, %v239
    %v251 = vpack.c.bf16 %v242, %v241
    %v252 = vpack.c.bf16 %v244, %v243
    %v253 = vld [vmem:[%s3] sm:$0xf]
    %v254 = vld [vmem:[%s3 + $0x4] sm:$0xf]
    %v255 = vld [vmem:[%s3 + $0x8] sm:$0xf]
    %v256 = vld [vmem:[%s3 + $0xc] sm:$0xf]
    %v257 = vld [vmem:[%s3 + $0x10] sm:$0xf]
    %v258 = vld [vmem:[%s3 + $0x14] sm:$0xf]
    %v259 = vld [vmem:[%s3 + $0x18] sm:$0x1]
    %v260 = vld [vmem:[%s4] sm:$0x1]
    %v262 = vlaneseq
    %v263 = vshrl.u32 %v262, 7
    %v264 = vsub.s32 0, %v263
    %v265 = vrot.slane %v260, %v264
    %v274 = vunpack.c.l.b16 %v253
    %v275 = vunpack.c.l.b16 %v254
    %v276 = vunpack.c.l.b16 %v255
    %v277 = vunpack.c.l.b16 %v256
    %v278 = vunpack.c.l.b16 %v257
    %v279 = vunpack.c.l.b16 %v258
    %v280 = vunpack.c.l.b16 %v259
    %v281 = vpack.c.b16 %v275, %v274
    %v282 = vpack.c.b16 %v277, %v276
    %v283 = vpack.c.b16 %v279, %v278
    %v284 = vpack.c.b16 %v280, %v280
    %vm288 = vcmask 408576
    %v290 = vsel %vm288, %v245, 0
    %v293 = vsel %vm288, %v246, 0
    %v296 = vsel %vm288, %v247, 0
    %v299 = vsel %vm288, %v248, 0
    %v302 = vsel %vm288, %v249, 0
    %v305 = vsel %vm288, %v250, 0
    %v308 = vsel %vm288, %v251, 0
    %v311 = vsel %vm288, %v252, 0
    %vm313 = vcmask 1040384
    %v315 = vsel %vm313, %v284, 0
    %317 = vmatprep.subr.bf16.mxu0 0
    %318 = vmatpush1.bf16.msra.mxu0 0
    %319 = vmatprep.subr.bf16.mxu0 0
    %320 = vmatpush1.bf16.msra.mxu0 0
    %321 = vmatprep.subr.bf16.mxu0 0
    %322 = vmatpush1.bf16.msra.mxu0 0
    %323 = vmatprep.subr.bf16.mxu0 0
    %324 = vmatpush1.bf16.msra.mxu0 0
    %325 = vmatprep.subr.bf16.mxu0 0
    %326 = vmatpush1.bf16.msra.mxu0 %v315
    %327 = vmatprep.subr.bf16.mxu0 0
    %328 = vmatpush1.bf16.msra.mxu0 %v283
    %329 = vmatprep.subr.bf16.mxu0 0
    %330 = vmatpush1.bf16.msra.mxu0 %v282
    %331 = vmatprep.subr.bf16.mxu0 0
    %332 = vmatpush1.bf16.msra.mxu0 %v281
    %333 = vmatprep.subr.bf16.mxu0 0
    %334 = vmatpush2.bf16.msra.mxu0 0
    %335 = vmatprep.subr.bf16.mxu0 0
    %336 = vmatpush2.bf16.msra.mxu0 0
    %337 = vmatprep.subr.bf16.mxu0 0
    %338 = vmatpush2.bf16.msra.mxu0 0
    %339 = vmatprep.subr.bf16.mxu0 0
    %340 = vmatpush2.bf16.msra.mxu0 0
    %341 = vmatprep.subr.bf16.mxu0 0
    %342 = vmatpush2.bf16.msra.mxu0 0
    %343 = vmatprep.subr.bf16.mxu0 0
    %344 = vmatpush2.bf16.msra.mxu0 0
    %345 = vmatprep.subr.bf16.mxu0 0
    %346 = vmatpush2.bf16.msra.mxu0 0
    %347 = vmatprep.subr.bf16.mxu0 0
    %348 = vmatpush2.bf16.msra.mxu0 0
    %349 = vmatprep.mubr.bf16.mxu0 0
    %350 = vmatmul.mubr.bf16.gmra.mxu0 %v290
    %v351 = vpop.f32.mrf.mxu0
    %v352 = vadd.f32 %v265, %v351
    %v353 = vpop.f32.mrf.mxu0
    %v354 = vpop.f32.mrf.mxu0
    %v355 = vadd.f32 %v265, %v354
    %v356 = vpop.f32.mrf.mxu0
    %357 = vmatprep.mubr.bf16.mxu0 0
    %358 = vmatmul.mubr.bf16.gmra.mxu0 %v293
    %v359 = vpop.f32.mrf.mxu0
    %v360 = vadd.f32 %v265, %v359
    %v361 = vpop.f32.mrf.mxu0
    %v362 = vpop.f32.mrf.mxu0
    %v363 = vadd.f32 %v265, %v362
    %v364 = vpop.f32.mrf.mxu0
    %365 = vmatprep.mubr.bf16.mxu0 0
    %366 = vmatmul.mubr.bf16.gmra.mxu0 %v296
    %v367 = vpop.f32.mrf.mxu0
    %v368 = vadd.f32 %v265, %v367
    %v369 = vpop.f32.mrf.mxu0
    %v370 = vpop.f32.mrf.mxu0
    %v371 = vadd.f32 %v265, %v370
    %v372 = vpop.f32.mrf.mxu0
    %373 = vmatprep.mubr.bf16.mxu0 0
    %374 = vmatmul.mubr.bf16.gmra.mxu0 %v299
    %v375 = vpop.f32.mrf.mxu0
    %v376 = vadd.f32 %v265, %v375
    %v377 = vpop.f32.mrf.mxu0
    %v378 = vpop.f32.mrf.mxu0
    %v379 = vadd.f32 %v265, %v378
    %v380 = vpop.f32.mrf.mxu0
    %381 = vmatprep.mubr.bf16.mxu0 0
    %382 = vmatmul.mubr.bf16.gmra.mxu0 %v302
    %v383 = vpop.f32.mrf.mxu0
    %v384 = vadd.f32 %v265, %v383
    %v385 = vpop.f32.mrf.mxu0
    %v386 = vpop.f32.mrf.mxu0
    %v387 = vadd.f32 %v265, %v386
    %v388 = vpop.f32.mrf.mxu0
    %389 = vmatprep.mubr.bf16.mxu0 0
    %390 = vmatmul.mubr.bf16.gmra.mxu0 %v305
    %v391 = vpop.f32.mrf.mxu0
    %v392 = vadd.f32 %v265, %v391
    %v393 = vpop.f32.mrf.mxu0
    %v394 = vpop.f32.mrf.mxu0
    %v395 = vadd.f32 %v265, %v394
    %v396 = vpop.f32.mrf.mxu0
    %397 = vmatprep.mubr.bf16.mxu0 0
    %398 = vmatmul.mubr.bf16.gmra.mxu0 %v308
    %v399 = vpop.f32.mrf.mxu0
    %v400 = vadd.f32 %v265, %v399
    %v401 = vpop.f32.mrf.mxu0
    %v402 = vpop.f32.mrf.mxu0
    %v403 = vadd.f32 %v265, %v402
    %v404 = vpop.f32.mrf.mxu0
    %405 = vmatprep.mubr.bf16.mxu0 0
    %406 = vmatmul.mubr.bf16.gmra.mxu0 %v311
    %v407 = vpop.f32.mrf.mxu0
    %v408 = vadd.f32 %v265, %v407
    %v409 = vpop.f32.mrf.mxu0
    %v410 = vpop.f32.mrf.mxu0
    %v411 = vadd.f32 %v265, %v410
    %v412 = vpop.f32.mrf.mxu0
    %413 = vdwg.mxu0
    %vm414 = vcmp.gt.f32.partialorder %v352, 0.0
    %vm415 = vcmp.gt.f32.partialorder %v355, 0.0
    %vm416 = vcmp.gt.f32.partialorder %v360, 0.0
    %vm417 = vcmp.gt.f32.partialorder %v363, 0.0
    %vm418 = vcmp.gt.f32.partialorder %v368, 0.0
    %vm419 = vcmp.gt.f32.partialorder %v371, 0.0
    %vm420 = vcmp.gt.f32.partialorder %v376, 0.0
    %vm421 = vcmp.gt.f32.partialorder %v379, 0.0
    %vm422 = vcmp.gt.f32.partialorder %v384, 0.0
    %vm423 = vcmp.gt.f32.partialorder %v387, 0.0
    %vm424 = vcmp.gt.f32.partialorder %v392, 0.0
    %vm425 = vcmp.gt.f32.partialorder %v395, 0.0
    %vm426 = vcmp.gt.f32.partialorder %v400, 0.0
    %vm427 = vcmp.gt.f32.partialorder %v403, 0.0
    %vm428 = vcmp.gt.f32.partialorder %v408, 0.0
    %vm429 = vcmp.gt.f32.partialorder %v411, 0.0
    %v430 = vmul.f32 %v352, 0.01
    %v431 = vmul.f32 %v355, 0.01
    %v432 = vmul.f32 %v360, 0.01
    %v433 = vmul.f32 %v363, 0.01
    %v434 = vmul.f32 %v368, 0.01
    %v435 = vmul.f32 %v371, 0.01
    %v436 = vmul.f32 %v376, 0.01
    %v437 = vmul.f32 %v379, 0.01
    %v438 = vmul.f32 %v384, 0.01
    %v439 = vmul.f32 %v387, 0.01
    %v440 = vmul.f32 %v392, 0.01
    %v441 = vmul.f32 %v395, 0.01
    %v442 = vmul.f32 %v400, 0.01
    %v443 = vmul.f32 %v403, 0.01
    %v444 = vmul.f32 %v408, 0.01
    %v445 = vmul.f32 %v411, 0.01
    %v446 = vsel %vm414, %v352, %v430
    %v447 = vsel %vm415, %v355, %v431
    %v448 = vsel %vm416, %v360, %v432
    %v449 = vsel %vm417, %v363, %v433
    %v450 = vsel %vm418, %v368, %v434
    %v451 = vsel %vm419, %v371, %v435
    %v452 = vsel %vm420, %v376, %v436
    %v453 = vsel %vm421, %v379, %v437
    %v454 = vsel %vm422, %v384, %v438
    %v455 = vsel %vm423, %v387, %v439
    %v456 = vsel %vm424, %v392, %v440
    %v457 = vsel %vm425, %v395, %v441
    %v458 = vsel %vm426, %v400, %v442
    %v459 = vsel %vm427, %v403, %v443
    %v460 = vsel %vm428, %v408, %v444
    %v461 = vsel %vm429, %v411, %v445
    %v462 = vld [vmem:[%s5] sm:$0xf]
    %v463 = vpack.c.bf16 %v447, %v446
    %v464 = vpack.c.bf16 %v449, %v448
    %v465 = vpack.c.bf16 %v451, %v450
    %v466 = vpack.c.bf16 %v453, %v452
    %v467 = vpack.c.bf16 %v455, %v454
    %v468 = vpack.c.bf16 %v457, %v456
    %v469 = vpack.c.bf16 %v459, %v458
    %v470 = vpack.c.bf16 %v461, %v460
    %v471 = vld [vmem:[%s6] sm:$0xff]
    %473 = vset.pattern.permute.xlu0 0
    %474 = vperm.xlu0 %473, %v471
    %v475 = vpop.permute.xlu0 %474
    %vm477 = vcmask 162816
    %v479 = vsel %vm477, %v462, 0
    %v482 = vsel %vm477, %v463, 0
    %v485 = vsel %vm477, %v464, 0
    %v488 = vsel %vm477, %v465, 0
    %v491 = vsel %vm477, %v466, 0
    %v494 = vsel %vm477, %v467, 0
    %v497 = vsel %vm477, %v468, 0
    %v500 = vsel %vm477, %v469, 0
    %v503 = vsel %vm477, %v470, 0
    %505 = vmatprep.subr.bf16.mxu0 0
    %506 = vmatpush1.bf16.xpose.msra.mxu0 %v503
    %507 = vmatprep.subr.bf16.mxu0 0
    %508 = vmatpush1.bf16.xpose.msra.mxu0 %v500
    %509 = vmatprep.subr.bf16.mxu0 0
    %510 = vmatpush1.bf16.xpose.msra.mxu0 %v497
    %511 = vmatprep.subr.bf16.mxu0 0
    %512 = vmatpush1.bf16.xpose.msra.mxu0 %v494
    %513 = vmatprep.subr.bf16.mxu0 0
    %514 = vmatpush1.bf16.xpose.msra.mxu0 %v491
    %515 = vmatprep.subr.bf16.mxu0 0
    %516 = vmatpush1.bf16.xpose.msra.mxu0 %v488
    %517 = vmatprep.subr.bf16.mxu0 0
    %518 = vmatpush1.bf16.xpose.msra.mxu0 %v485
    %519 = vmatprep.subr.bf16.mxu0 0
    %520 = vmatpush1.bf16.xpose.msra.mxu0 %v482
    %521 = vmatprep.subr.bf16.mxu0 0
    %522 = vmatpush2.bf16.xpose.msra.mxu0 0
    %523 = vmatprep.subr.bf16.mxu0 0
    %524 = vmatpush2.bf16.xpose.msra.mxu0 0
    %525 = vmatprep.subr.bf16.mxu0 0
    %526 = vmatpush2.bf16.xpose.msra.mxu0 0
    %527 = vmatprep.subr.bf16.mxu0 0
    %528 = vmatpush2.bf16.xpose.msra.mxu0 0
    %529 = vmatprep.subr.bf16.mxu0 0
    %530 = vmatpush2.bf16.xpose.msra.mxu0 0
    %531 = vmatprep.subr.bf16.mxu0 0
    %532 = vmatpush2.bf16.xpose.msra.mxu0 0
    %533 = vmatprep.subr.bf16.mxu0 0
    %534 = vmatpush2.bf16.xpose.msra.mxu0 0
    %535 = vmatprep.subr.bf16.mxu0 0
    %536 = vmatpush2.bf16.xpose.msra.mxu0 0
    %537 = vmatprep.mubr.bf16.mxu0 0
    %538 = vmatmul.mubr.bf16.gmra.mxu0 %v479
    %v539 = vpop.f32.mrf.mxu0
    %v540 = vadd.f32 %v475, %v539
    %v541 = vpop.f32.mrf.mxu0
    %v542 = vpop.f32.mrf.mxu0
    %v543 = vpop.f32.mrf.mxu0
    %544 = vdwg.mxu0
    %vm545 = vcmp.gt.f32.partialorder %v540, 20.0
    %v546 = vmul.f32 %v540, 1.442695
    %v547 = vpow.pop %v546
    %v548 = vadd.f32 %v547, 1.0
    %v549 = vlog2.pop %v548
    %v550 = vmul.f32 %v549, 0.6931472
    %v551 = vmul.f32 -0.5, %v547
    %v552 = vadd.f32 %v551, 1.0
    %v553 = vmul.f32 %v552, %v547
    %v554 = vand.u32 2147483647, %v547
    %vm555 = vcmp.lt.f32.partialorder %v554, 0.0004427343
    %v556 = vsel %vm555, %v553, %v550
    %v557 = vsel %vm545, %v540, %v556
    %v558 = vadd.f32 %v557, 0.001
    %559 = vst [vmem:[#allocation2] sm:$0xff] %v558
    // Predicated region
    $region30: #{tpu_custom_call.1} parent=1 // pred_check
      _
    $region31: #{tpu_custom_call.1} parent=1 // pred_check_branch
      %561 = sbr.rel (0) target = $region33
    $region32: #{tpu_custom_call.1} parent=1 // pred_region
      %s563 = ssub.s32 128, 128
      %564 = vsyncadd [#allocation3], %s563
      %s566 = sshll.u32 [#allocation2], 4
      %s567 = int_to_ptr.vmem [resolvable:$true] %s566
      %569 = dma.vmem_to_hbm [thread:$0]  %s567, 128, %s7, [#allocation3]
    $region33: #{tpu_custom_call.1} parent=1 // pred_fallthru
      _
    // Predicated region
    $region34: #{tpu_custom_call.1} parent=1 // pred_check
      _
    $region35: #{tpu_custom_call.1} parent=1 // pred_check_branch
      %571 = sbr.rel (0) target = $region37
    $region36: #{tpu_custom_call.1} parent=1 // pred_region
      %572 = dma.done [#allocation3], 128
    $region37: #{tpu_custom_call.1} parent=1 // pred_fallthru
      _
    %573 = vsyncpa [#allocation3], 1

</llo_original>
